<compile_context>
chip_gen: v6e
topology: v6e:2x2x1
jax: 0.10.0
libtpu: 0.0.40
codegen_flags: <defaults>
</compile_context>

<pallas_src>
import functools

import jax
import jax.numpy as jnp
from jax import lax
from jax.experimental import pallas as pl
from jax.experimental.pallas import tpu as pltpu


def _foreach(n, body):
    """Run body(t) for t in [0, n). Fully unrolled for small n (full LLO
    visibility); bounded-unroll fori_loop for big tiles to cap code size."""
    if n <= 64:
        for t in range(n):
            body(t)
    else:
        def _step(t, carry):
            body(t)
            return carry
        lax.fori_loop(0, n, _step, 0, unroll=8)


def _gather_rows_vmem_kernel(ids_ref, table_ref, out_ref, *, token_tile, vocab):
    # ids_ref:   (Np,) int32 token ids in SMEM (scalar-prefetched, padded)
    # table_ref: (V, D) embedding table resident in VMEM (constant block index)
    # out_ref:   (token_tile, D) VMEM output block for this grid step
    base = pl.program_id(0) * token_tile

    def copy_row(t):
        row = jnp.clip(ids_ref[base + t], 0, vocab - 1)   # scalar-slot clamp
        out_ref[pl.ds(t, 1), :] = table_ref[pl.ds(row, 1), :]

    _foreach(token_tile, copy_row)


def _gather_rows_hbm_kernel(ids_ref, table_hbm, out_ref, sem, *, token_tile, vocab):
    # ids_ref:   (Np,) int32 token ids in SMEM
    # table_hbm: (V, D) embedding table left in HBM (memory_space=pl.ANY)
    # out_ref:   (token_tile, D) VMEM output block for this grid step
    # sem:       (1,) shared DMA semaphore for every row copy of this step
    base = pl.program_id(0) * token_tile

    def issue(t):
        row = jnp.clip(ids_ref[base + t], 0, vocab - 1)
        pltpu.make_async_copy(
            table_hbm.at[pl.ds(row, 1), :],   # (1, D) row in HBM
            out_ref.at[pl.ds(t, 1), :],       # (1, D) slot in the output block
            sem.at[0],
        ).start()

    def drain(t):
        # Waits on the shared semaphore are byte-counted; one same-shaped
        # (1, D) descriptor per issued copy drains exactly what was signalled.
        pltpu.make_async_copy(
            table_hbm.at[pl.ds(0, 1), :],
            out_ref.at[pl.ds(t, 1), :],
            sem.at[0],
        ).wait()

    # All scalar id reads + DMA issues happen before any wait (keeps sst->sld
    # forwarding intact and lets all row gathers of the step overlap).
    _foreach(token_tile, issue)
    _foreach(token_tile, drain)
    # Cross-step double buffering of the gathers (P4) is intentionally left
    # out: with a large token_tile only ~one DMA latency per step is exposed.


def _pick_token_tile(n_tokens, d, itemsize, max_tile, vmem_budget):
    row_align = max(8, 32 // max(itemsize, 1))   # 8 f32 / 16 bf16 / 32 int8
    tile = min(max_tile, n_tokens)
    # The output block is double-buffered by the pipeline: keep 2*tile*D*bytes
    # inside a budget that is safe on every chip's scoped-VMEM default.
    while tile > row_align and 2 * tile * d * itemsize > vmem_budget:
        tile = max(tile // 2, row_align)
    if tile < n_tokens:
        tile = max((tile // row_align) * row_align, row_align)
    return tile


def pre_continuous_block(ids, emb_weight, *, max_token_tile=512, force_hbm=False):
    """Forward pass of PreContinuousBlock: {'x': embedding_lookup(ids)}."""
    B, S = ids.shape
    V, D = emb_weight.shape
    N = B * S
    itemsize = jnp.dtype(emb_weight.dtype).itemsize

    tile = _pick_token_tile(N, D, itemsize, max_token_tile, vmem_budget=8 << 20)
    grid = pl.cdiv(N, tile)
    n_padded = grid * tile

    # Only the int32 ids are padded (a few bytes).  The output is emitted at
    # exactly (N, D), so the final reshape is free and there is no slice copy.
    # Padded tail slots gather row 0 into the last VMEM block but fall outside
    # the (N, D) output and are never written back to HBM.
    ids_flat = ids.reshape(N).astype(jnp.int32)
    if n_padded != N:
        ids_flat = jnp.pad(ids_flat, (0, n_padded - N))
    # TODO(synk): for very long sequences (N >~ 1e5) switch the ids from
    # whole-array scalar prefetch to per-tile SMEM-blocked input to bound SMEM.

    table_bytes = V * D * itemsize
    use_vmem_table = (not force_hbm) and table_bytes <= (4 << 20)

    if use_vmem_table:
        kernel = functools.partial(_gather_rows_vmem_kernel, token_tile=tile, vocab=V)
        # Whole table in VMEM; constant block index -> fetched only once.
        in_specs = [pl.BlockSpec((V, D), lambda i, ids: (0, 0))]
        scratch_shapes = []
    else:
        kernel = functools.partial(_gather_rows_hbm_kernel, token_tile=tile, vocab=V)
        in_specs = [pl.BlockSpec(memory_space=pl.ANY)]       # table stays in HBM
        scratch_shapes = [pltpu.SemaphoreType.DMA((1,))]     # one shared DMA sem

    out = pl.pallas_call(
        kernel,
        out_shape=jax.ShapeDtypeStruct((N, D), emb_weight.dtype),
        grid_spec=pltpu.PrefetchScalarGridSpec(
            num_scalar_prefetch=1,                    # ids -> SMEM
            grid=(grid,),
            in_specs=in_specs,
            out_specs=pl.BlockSpec((tile, D), lambda i, ids: (i, 0)),
            scratch_shapes=scratch_shapes,
        ),
        compiler_params=pltpu.CompilerParams(
            dimension_semantics=("parallel",),        # independent token tiles (megacore-shardable)
        ),
    )(ids_flat, emb_weight)

    return {"x": out.reshape(B, S, D)}


if __name__ == "__main__":
    # Small shapes consistent with the module: batch=2, seq=8,
    # vocabulary_size=32, model_dimension=32.
    B, S = 2, 8
    VOCAB, DIM = 32, 32

    key = jax.random.PRNGKey(0)
    k_ids, k_emb = jax.random.split(key)

    ids = jax.random.randint(k_ids, (B, S), 0, VOCAB, dtype=jnp.int32)
    # nn.Embedding default init: N(0, 1)
    emb_weight = jax.random.normal(k_emb, (VOCAB, DIM), dtype=jnp.float32)

    ref = emb_weight[ids]  # reference semantics of nn.Embedding

    # Default dispatch: small table -> VMEM-resident fast path.
    out = pre_continuous_block(ids, emb_weight)
    x = jax.block_until_ready(out["x"])
    assert x.shape == (B, S, DIM), x.shape
    assert bool(jnp.array_equal(x, ref)), "VMEM-path mismatch vs reference gather"

    # Also exercise the large-table HBM DMA-gather path for coverage.
    out_hbm = pre_continuous_block(ids, emb_weight, force_hbm=True)
    x_hbm = jax.block_until_ready(out_hbm["x"])
    assert bool(jnp.array_equal(x_hbm, ref)), "HBM-path mismatch vs reference gather"

    print("KERNEL_OK")
</pallas_src>

<mosaic_0001>
module attributes {stable_mosaic.version = 11 : i64} {
  func.func @_gather_rows_vmem_kernel(%arg0: i32, %arg1: memref<16xi32, #tpu.memory_space<smem>>, %arg2: memref<32x32xf32, #tpu.memory_space<vmem>>, %arg3: memref<16x32xf32, #tpu.memory_space<vmem>>) attributes {dimension_semantics = [#tpu.dimension_semantics<parallel>], iteration_bounds = array<i64: 1>, scalar_prefetch = 1 : i64, scratch_operands = 0 : i64, tpu.core_type = #tpu.core_type<tc>, window_params = [{pipeline_mode = #tpu.pipeline_mode<synchronous>, transform_indices = @transform_0, window_bounds = array<i64: 32, 32>}, {transform_indices = @transform_1, window_bounds = array<i64: 16, 32>}]} {
    %c16_i32 = arith.constant 16 : i32
    %0 = arith.muli %arg0, %c16_i32 : i32
    %c0_i32 = arith.constant 0 : i32
    %1 = arith.addi %0, %c0_i32 : i32
    %2 = arith.index_cast %1 : i32 to index
    %3 = memref.load %arg1[%2] : memref<16xi32, #tpu.memory_space<smem>>
    %c0_i32_0 = arith.constant 0 : i32
    %c31_i32 = arith.constant 31 : i32
    %4 = arith.maxsi %c0_i32_0, %3 : i32
    %5 = arith.minsi %c31_i32, %4 : i32
    %6 = arith.index_cast %5 : i32 to index
    %c0 = arith.constant 0 : index
    %7 = vector.load %arg2[%6, %c0] : memref<32x32xf32, #tpu.memory_space<vmem>>, vector<1x32xf32>
    %c0_1 = arith.constant 0 : index
    %c0_2 = arith.constant 0 : index
    %8 = vector.load %arg3[%c0_1, %c0_2] : memref<16x32xf32, #tpu.memory_space<vmem>>, vector<1x32xf32>
    tpu.vector_store %arg3[%c0_1, %c0_2], %7 {strides = array<i32>} : memref<16x32xf32, #tpu.memory_space<vmem>>, vector<1x32xf32>,
    %c1_i32 = arith.constant 1 : i32
    %9 = arith.addi %0, %c1_i32 : i32
    %10 = arith.index_cast %9 : i32 to index
    %11 = memref.load %arg1[%10] : memref<16xi32, #tpu.memory_space<smem>>
    %c0_i32_3 = arith.constant 0 : i32
    %c31_i32_4 = arith.constant 31 : i32
    %12 = arith.maxsi %c0_i32_3, %11 : i32
    %13 = arith.minsi %c31_i32_4, %12 : i32
    %14 = arith.index_cast %13 : i32 to index
    %c0_5 = arith.constant 0 : index
    %15 = vector.load %arg2[%14, %c0_5] : memref<32x32xf32, #tpu.memory_space<vmem>>, vector<1x32xf32>
    %c1 = arith.constant 1 : index
    %c0_6 = arith.constant 0 : index
    %16 = vector.load %arg3[%c1, %c0_6] : memref<16x32xf32, #tpu.memory_space<vmem>>, vector<1x32xf32>
    tpu.vector_store %arg3[%c1, %c0_6], %15 {strides = array<i32>} : memref<16x32xf32, #tpu.memory_space<vmem>>, vector<1x32xf32>,
    %c2_i32 = arith.constant 2 : i32
    %17 = arith.addi %0, %c2_i32 : i32
    %18 = arith.index_cast %17 : i32 to index
    %19 = memref.load %arg1[%18] : memref<16xi32, #tpu.memory_space<smem>>
    %c0_i32_7 = arith.constant 0 : i32
    %c31_i32_8 = arith.constant 31 : i32
    %20 = arith.maxsi %c0_i32_7, %19 : i32
    %21 = arith.minsi %c31_i32_8, %20 : i32
    %22 = arith.index_cast %21 : i32 to index
    %c0_9 = arith.constant 0 : index
    %23 = vector.load %arg2[%22, %c0_9] : memref<32x32xf32, #tpu.memory_space<vmem>>, vector<1x32xf32>
    %c2 = arith.constant 2 : index
    %c0_10 = arith.constant 0 : index
    %24 = vector.load %arg3[%c2, %c0_10] : memref<16x32xf32, #tpu.memory_space<vmem>>, vector<1x32xf32>
    tpu.vector_store %arg3[%c2, %c0_10], %23 {strides = array<i32>} : memref<16x32xf32, #tpu.memory_space<vmem>>, vector<1x32xf32>,
    %c3_i32 = arith.constant 3 : i32
    %25 = arith.addi %0, %c3_i32 : i32
    %26 = arith.index_cast %25 : i32 to index
    %27 = memref.load %arg1[%26] : memref<16xi32, #tpu.memory_space<smem>>
    %c0_i32_11 = arith.constant 0 : i32
    %c31_i32_12 = arith.constant 31 : i32
    %28 = arith.maxsi %c0_i32_11, %27 : i32
    %29 = arith.minsi %c31_i32_12, %28 : i32
    %30 = arith.index_cast %29 : i32 to index
    %c0_13 = arith.constant 0 : index
    %31 = vector.load %arg2[%30, %c0_13] : memref<32x32xf32, #tpu.memory_space<vmem>>, vector<1x32xf32>
    %c3 = arith.constant 3 : index
    %c0_14 = arith.constant 0 : index
    %32 = vector.load %arg3[%c3, %c0_14] : memref<16x32xf32, #tpu.memory_space<vmem>>, vector<1x32xf32>
    tpu.vector_store %arg3[%c3, %c0_14], %31 {strides = array<i32>} : memref<16x32xf32, #tpu.memory_space<vmem>>, vector<1x32xf32>,
    %c4_i32 = arith.constant 4 : i32
    %33 = arith.addi %0, %c4_i32 : i32
    %34 = arith.index_cast %33 : i32 to index
    %35 = memref.load %arg1[%34] : memref<16xi32, #tpu.memory_space<smem>>
    %c0_i32_15 = arith.constant 0 : i32
    %c31_i32_16 = arith.constant 31 : i32
    %36 = arith.maxsi %c0_i32_15, %35 : i32
    %37 = arith.minsi %c31_i32_16, %36 : i32
    %38 = arith.index_cast %37 : i32 to index
    %c0_17 = arith.constant 0 : index
    %39 = vector.load %arg2[%38, %c0_17] : memref<32x32xf32, #tpu.memory_space<vmem>>, vector<1x32xf32>
    %c4 = arith.constant 4 : index
    %c0_18 = arith.constant 0 : index
    %40 = vector.load %arg3[%c4, %c0_18] : memref<16x32xf32, #tpu.memory_space<vmem>>, vector<1x32xf32>
    tpu.vector_store %arg3[%c4, %c0_18], %39 {strides = array<i32>} : memref<16x32xf32, #tpu.memory_space<vmem>>, vector<1x32xf32>,
    %c5_i32 = arith.constant 5 : i32
    %41 = arith.addi %0, %c5_i32 : i32
    %42 = arith.index_cast %41 : i32 to index
    %43 = memref.load %arg1[%42] : memref<16xi32, #tpu.memory_space<smem>>
    %c0_i32_19 = arith.constant 0 : i32
    %c31_i32_20 = arith.constant 31 : i32
    %44 = arith.maxsi %c0_i32_19, %43 : i32
    %45 = arith.minsi %c31_i32_20, %44 : i32
    %46 = arith.index_cast %45 : i32 to index
    %c0_21 = arith.constant 0 : index
    %47 = vector.load %arg2[%46, %c0_21] : memref<32x32xf32, #tpu.memory_space<vmem>>, vector<1x32xf32>
    %c5 = arith.constant 5 : index
    %c0_22 = arith.constant 0 : index
    %48 = vector.load %arg3[%c5, %c0_22] : memref<16x32xf32, #tpu.memory_space<vmem>>, vector<1x32xf32>
    tpu.vector_store %arg3[%c5, %c0_22], %47 {strides = array<i32>} : memref<16x32xf32, #tpu.memory_space<vmem>>, vector<1x32xf32>,
    %c6_i32 = arith.constant 6 : i32
    %49 = arith.addi %0, %c6_i32 : i32
    %50 = arith.index_cast %49 : i32 to index
    %51 = memref.load %arg1[%50] : memref<16xi32, #tpu.memory_space<smem>>
    %c0_i32_23 = arith.constant 0 : i32
    %c31_i32_24 = arith.constant 31 : i32
    %52 = arith.maxsi %c0_i32_23, %51 : i32
    %53 = arith.minsi %c31_i32_24, %52 : i32
    %54 = arith.index_cast %53 : i32 to index
    %c0_25 = arith.constant 0 : index
    %55 = vector.load %arg2[%54, %c0_25] : memref<32x32xf32, #tpu.memory_space<vmem>>, vector<1x32xf32>
    %c6 = arith.constant 6 : index
    %c0_26 = arith.constant 0 : index
    %56 = vector.load %arg3[%c6, %c0_26] : memref<16x32xf32, #tpu.memory_space<vmem>>, vector<1x32xf32>
    tpu.vector_store %arg3[%c6, %c0_26], %55 {strides = array<i32>} : memref<16x32xf32, #tpu.memory_space<vmem>>, vector<1x32xf32>,
    %c7_i32 = arith.constant 7 : i32
    %57 = arith.addi %0, %c7_i32 : i32
    %58 = arith.index_cast %57 : i32 to index
    %59 = memref.load %arg1[%58] : memref<16xi32, #tpu.memory_space<smem>>
    %c0_i32_27 = arith.constant 0 : i32
    %c31_i32_28 = arith.constant 31 : i32
    %60 = arith.maxsi %c0_i32_27, %59 : i32
    %61 = arith.minsi %c31_i32_28, %60 : i32
    %62 = arith.index_cast %61 : i32 to index
    %c0_29 = arith.constant 0 : index
    %63 = vector.load %arg2[%62, %c0_29] : memref<32x32xf32, #tpu.memory_space<vmem>>, vector<1x32xf32>
    %c7 = arith.constant 7 : index
    %c0_30 = arith.constant 0 : index
    %64 = vector.load %arg3[%c7, %c0_30] : memref<16x32xf32, #tpu.memory_space<vmem>>, vector<1x32xf32>
    tpu.vector_store %arg3[%c7, %c0_30], %63 {strides = array<i32>} : memref<16x32xf32, #tpu.memory_space<vmem>>, vector<1x32xf32>,
    %c8_i32 = arith.constant 8 : i32
    %65 = arith.addi %0, %c8_i32 : i32
    %66 = arith.index_cast %65 : i32 to index
    %67 = memref.load %arg1[%66] : memref<16xi32, #tpu.memory_space<smem>>
    %c0_i32_31 = arith.constant 0 : i32
    %c31_i32_32 = arith.constant 31 : i32
    %68 = arith.maxsi %c0_i32_31, %67 : i32
    %69 = arith.minsi %c31_i32_32, %68 : i32
    %70 = arith.index_cast %69 : i32 to index
    %c0_33 = arith.constant 0 : index
    %71 = vector.load %arg2[%70, %c0_33] : memref<32x32xf32, #tpu.memory_space<vmem>>, vector<1x32xf32>
    %c8 = arith.constant 8 : index
    %c0_34 = arith.constant 0 : index
    %72 = vector.load %arg3[%c8, %c0_34] : memref<16x32xf32, #tpu.memory_space<vmem>>, vector<1x32xf32>
    tpu.vector_store %arg3[%c8, %c0_34], %71 {strides = array<i32>} : memref<16x32xf32, #tpu.memory_space<vmem>>, vector<1x32xf32>,
    %c9_i32 = arith.constant 9 : i32
    %73 = arith.addi %0, %c9_i32 : i32
    %74 = arith.index_cast %73 : i32 to index
    %75 = memref.load %arg1[%74] : memref<16xi32, #tpu.memory_space<smem>>
    %c0_i32_35 = arith.constant 0 : i32
    %c31_i32_36 = arith.constant 31 : i32
    %76 = arith.maxsi %c0_i32_35, %75 : i32
    %77 = arith.minsi %c31_i32_36, %76 : i32
    %78 = arith.index_cast %77 : i32 to index
    %c0_37 = arith.constant 0 : index
    %79 = vector.load %arg2[%78, %c0_37] : memref<32x32xf32, #tpu.memory_space<vmem>>, vector<1x32xf32>
    %c9 = arith.constant 9 : index
    %c0_38 = arith.constant 0 : index
    %80 = vector.load %arg3[%c9, %c0_38] : memref<16x32xf32, #tpu.memory_space<vmem>>, vector<1x32xf32>
    tpu.vector_store %arg3[%c9, %c0_38], %79 {strides = array<i32>} : memref<16x32xf32, #tpu.memory_space<vmem>>, vector<1x32xf32>,
    %c10_i32 = arith.constant 10 : i32
    %81 = arith.addi %0, %c10_i32 : i32
    %82 = arith.index_cast %81 : i32 to index
    %83 = memref.load %arg1[%82] : memref<16xi32, #tpu.memory_space<smem>>
    %c0_i32_39 = arith.constant 0 : i32
    %c31_i32_40 = arith.constant 31 : i32
    %84 = arith.maxsi %c0_i32_39, %83 : i32
    %85 = arith.minsi %c31_i32_40, %84 : i32
    %86 = arith.index_cast %85 : i32 to index
    %c0_41 = arith.constant 0 : index
    %87 = vector.load %arg2[%86, %c0_41] : memref<32x32xf32, #tpu.memory_space<vmem>>, vector<1x32xf32>
    %c10 = arith.constant 10 : index
    %c0_42 = arith.constant 0 : index
    %88 = vector.load %arg3[%c10, %c0_42] : memref<16x32xf32, #tpu.memory_space<vmem>>, vector<1x32xf32>
    tpu.vector_store %arg3[%c10, %c0_42], %87 {strides = array<i32>} : memref<16x32xf32, #tpu.memory_space<vmem>>, vector<1x32xf32>,
    %c11_i32 = arith.constant 11 : i32
    %89 = arith.addi %0, %c11_i32 : i32
    %90 = arith.index_cast %89 : i32 to index
    %91 = memref.load %arg1[%90] : memref<16xi32, #tpu.memory_space<smem>>
    %c0_i32_43 = arith.constant 0 : i32
    %c31_i32_44 = arith.constant 31 : i32
    %92 = arith.maxsi %c0_i32_43, %91 : i32
    %93 = arith.minsi %c31_i32_44, %92 : i32
    %94 = arith.index_cast %93 : i32 to index
    %c0_45 = arith.constant 0 : index
    %95 = vector.load %arg2[%94, %c0_45] : memref<32x32xf32, #tpu.memory_space<vmem>>, vector<1x32xf32>
    %c11 = arith.constant 11 : index
    %c0_46 = arith.constant 0 : index
    %96 = vector.load %arg3[%c11, %c0_46] : memref<16x32xf32, #tpu.memory_space<vmem>>, vector<1x32xf32>
    tpu.vector_store %arg3[%c11, %c0_46], %95 {strides = array<i32>} : memref<16x32xf32, #tpu.memory_space<vmem>>, vector<1x32xf32>,
    %c12_i32 = arith.constant 12 : i32
    %97 = arith.addi %0, %c12_i32 : i32
    %98 = arith.index_cast %97 : i32 to index
    %99 = memref.load %arg1[%98] : memref<16xi32, #tpu.memory_space<smem>>
    %c0_i32_47 = arith.constant 0 : i32
    %c31_i32_48 = arith.constant 31 : i32
    %100 = arith.maxsi %c0_i32_47, %99 : i32
    %101 = arith.minsi %c31_i32_48, %100 : i32
    %102 = arith.index_cast %101 : i32 to index
    %c0_49 = arith.constant 0 : index
    %103 = vector.load %arg2[%102, %c0_49] : memref<32x32xf32, #tpu.memory_space<vmem>>, vector<1x32xf32>
    %c12 = arith.constant 12 : index
    %c0_50 = arith.constant 0 : index
    %104 = vector.load %arg3[%c12, %c0_50] : memref<16x32xf32, #tpu.memory_space<vmem>>, vector<1x32xf32>
    tpu.vector_store %arg3[%c12, %c0_50], %103 {strides = array<i32>} : memref<16x32xf32, #tpu.memory_space<vmem>>, vector<1x32xf32>,
    %c13_i32 = arith.constant 13 : i32
    %105 = arith.addi %0, %c13_i32 : i32
    %106 = arith.index_cast %105 : i32 to index
    %107 = memref.load %arg1[%106] : memref<16xi32, #tpu.memory_space<smem>>
    %c0_i32_51 = arith.constant 0 : i32
    %c31_i32_52 = arith.constant 31 : i32
    %108 = arith.maxsi %c0_i32_51, %107 : i32
    %109 = arith.minsi %c31_i32_52, %108 : i32
    %110 = arith.index_cast %109 : i32 to index
    %c0_53 = arith.constant 0 : index
    %111 = vector.load %arg2[%110, %c0_53] : memref<32x32xf32, #tpu.memory_space<vmem>>, vector<1x32xf32>
    %c13 = arith.constant 13 : index
    %c0_54 = arith.constant 0 : index
    %112 = vector.load %arg3[%c13, %c0_54] : memref<16x32xf32, #tpu.memory_space<vmem>>, vector<1x32xf32>
    tpu.vector_store %arg3[%c13, %c0_54], %111 {strides = array<i32>} : memref<16x32xf32, #tpu.memory_space<vmem>>, vector<1x32xf32>,
    %c14_i32 = arith.constant 14 : i32
    %113 = arith.addi %0, %c14_i32 : i32
    %114 = arith.index_cast %113 : i32 to index
    %115 = memref.load %arg1[%114] : memref<16xi32, #tpu.memory_space<smem>>
    %c0_i32_55 = arith.constant 0 : i32
    %c31_i32_56 = arith.constant 31 : i32
    %116 = arith.maxsi %c0_i32_55, %115 : i32
    %117 = arith.minsi %c31_i32_56, %116 : i32
    %118 = arith.index_cast %117 : i32 to index
    %c0_57 = arith.constant 0 : index
    %119 = vector.load %arg2[%118, %c0_57] : memref<32x32xf32, #tpu.memory_space<vmem>>, vector<1x32xf32>
    %c14 = arith.constant 14 : index
    %c0_58 = arith.constant 0 : index
    %120 = vector.load %arg3[%c14, %c0_58] : memref<16x32xf32, #tpu.memory_space<vmem>>, vector<1x32xf32>
    tpu.vector_store %arg3[%c14, %c0_58], %119 {strides = array<i32>} : memref<16x32xf32, #tpu.memory_space<vmem>>, vector<1x32xf32>,
    %c15_i32 = arith.constant 15 : i32
    %121 = arith.addi %0, %c15_i32 : i32
    %122 = arith.index_cast %121 : i32 to index
    %123 = memref.load %arg1[%122] : memref<16xi32, #tpu.memory_space<smem>>
    %c0_i32_59 = arith.constant 0 : i32
    %c31_i32_60 = arith.constant 31 : i32
    %124 = arith.maxsi %c0_i32_59, %123 : i32
    %125 = arith.minsi %c31_i32_60, %124 : i32
    %126 = arith.index_cast %125 : i32 to index
    %c0_61 = arith.constant 0 : index
    %127 = vector.load %arg2[%126, %c0_61] : memref<32x32xf32, #tpu.memory_space<vmem>>, vector<1x32xf32>
    %c15 = arith.constant 15 : index
    %c0_62 = arith.constant 0 : index
    %128 = vector.load %arg3[%c15, %c0_62] : memref<16x32xf32, #tpu.memory_space<vmem>>, vector<1x32xf32>
    tpu.vector_store %arg3[%c15, %c0_62], %127 {strides = array<i32>} : memref<16x32xf32, #tpu.memory_space<vmem>>, vector<1x32xf32>,
    return
  }
  func.func @transform_0(%arg0: i32, %arg1: memref<16xi32, #tpu.memory_space<smem>>) -> (i32, i32) {
    %c0_i32 = arith.constant 0 : i32
    %c0_i32_0 = arith.constant 0 : i32
    %c0_i32_1 = arith.constant 0 : i32
    return %c0_i32, %c0_i32_0 : i32, i32
  }
  func.func @transform_1(%arg0: i32, %arg1: memref<16xi32, #tpu.memory_space<smem>>) -> (i32, i32) {
    %c0_i32 = arith.constant 0 : i32
    %c0_i32_0 = arith.constant 0 : i32
    return %arg0, %c0_i32 : i32, i32
  }
}

</mosaic_0001>

<llo_original>
// kernel: tpu_custom_call.1
$region0: #{tpu_custom_call.1}
  #allocation0 [shape = 'u32[]', space=smem, size = 0x4, offset = 0x4, fixed_abs, tag = 'smem constant byte address 0x4 - core index']
  #allocation1 [shape = 'u32[144,128]{1,0:T(1,128)}', space=vmem, size = 0x12000, scoped, tag = 'internal scratch']
  #allocation2 [shape = 's32[1]{0}', space=sflag, size = 0x4, scoped, tag = 'scoped memory for tpu_custom_call.1']
  #allocation3 [shape = 'u8[512]{0}', space=smem, size = 0x200, scoped, tag = 'prefetched SMEM operand 0']
  %s0 = inlined_call_operand.hbm [shape: s32[16], index: 0, kind: input, shape index: {}]
  %s1 = inlined_call_operand.hbm [shape: f32[32,32], index: 1, kind: input, shape index: {}]
  %s2 = inlined_call_operand.hbm [shape: f32[16,32], index: 2, kind: output, shape index: {}]
  %s3 = sld [smem:[#allocation0]]
  $region18: #{tpu_custom_call.1} parent=0
    _
  %s5 = ssub.s32 1, %s3
  %s6 = scalar_select 0, %s5, %s3
  %8 = dma.hbm_to_smem %s0, 16, [#allocation3], [#allocation2]
  %9 = dma.done [#allocation2], 16
  %10 = sfence
  $region1: #{tpu_custom_call.1} parent=0
    #allocation4 [shape = 'u8[16384]{0}', space=vmem, size = 0x4000, scoped, tag = 'input window, operand 1, single buffered']
    #allocation5 [shape = 's32[1]{0}', space=sflag, size = 0x4, scoped, tag = 'scoped memory for tpu_custom_call.1']
    #allocation6 [shape = 's32[1]{0}', space=sflag, size = 0x4, scoped, tag = 'scoped memory for tpu_custom_call.1']
    #allocation7 [shape = 'u8[8192]{0}', space=vmem, size = 0x2000, scoped, tag = 'output window, operand 0, single buffered']
    %11 = vsyncpa [#allocation5], 0
    %12 = vsyncpa [#allocation6], 0
    // Predicated region
    $region2: #{tpu_custom_call.1} parent=1 // pred_check
      _
    $region3: #{tpu_custom_call.1} parent=1 // pred_check_branch
      %14 = sbr.rel (0) target = $region5
    $region4: #{tpu_custom_call.1} parent=1 // pred_region
      %s16 = ssub.s32 512, 512
      %17 = vsyncadd [#allocation5], %s16
      %s18 = sshll.u32 [#allocation4], 4
      %s19 = int_to_ptr.vmem [resolvable:$true] %s18
      %24 = dma.hbm_to_vmem [thread:$0]  %s1, 512, %s19, [#allocation5], 128, 128, 8
    $region5: #{tpu_custom_call.1} parent=1 // pred_fallthru
      _
    // Predicated region
    $region6: #{tpu_custom_call.1} parent=1 // pred_check
      _
    $region7: #{tpu_custom_call.1} parent=1 // pred_check_branch
      %26 = sbr.rel (0) target = $region9
    $region8: #{tpu_custom_call.1} parent=1 // pred_region
      %27 = dma.done [#allocation5], 512
    $region9: #{tpu_custom_call.1} parent=1 // pred_fallthru
      _
    %s28 = smul.u32 0, 16
    %s29 = sld [smem:[#allocation3 + %s28]]
    %p30 = scmp.gt.s32.totalorder %s29, 0
    %s31 = scalar_select %p30, %s29, 0
    %p32 = scmp.lt.s32.totalorder %s31, 31
    %s33 = scalar_select %p32, %s31, 31
    %s34 = scalar_lea.vmem [#allocation4], %s33
    %v35 = vld [vmem:[%s34] sm:$0x1]
    %vm36 = vcmask 253952
    %37 = vst.msk [vmem:[#allocation7] sm:$0x1] %vm36, %v35
    %s38 = sadd.s32 %s28, 1
    %s39 = sld [smem:[#allocation3 + %s38]]
    %p40 = scmp.gt.s32.totalorder %s39, 0
    %s41 = scalar_select %p40, %s39, 0
    %p42 = scmp.lt.s32.totalorder %s41, 31
    %s43 = scalar_select %p42, %s41, 31
    %s44 = scalar_lea.vmem [#allocation4], %s43
    %v45 = vld [vmem:[%s44] sm:$0x1]
    %46 = vst.msk [vmem:[#allocation7 + $0x1] sm:$0x1] %vm36, %v45
    %s47 = sadd.s32 %s28, 2
    %s48 = sld [smem:[#allocation3 + %s47]]
    %p49 = scmp.gt.s32.totalorder %s48, 0
    %s50 = scalar_select %p49, %s48, 0
    %p51 = scmp.lt.s32.totalorder %s50, 31
    %s52 = scalar_select %p51, %s50, 31
    %s53 = scalar_lea.vmem [#allocation4], %s52
    %v54 = vld [vmem:[%s53] sm:$0x1]
    %55 = vst.msk [vmem:[#allocation7 + $0x2] sm:$0x1] %vm36, %v54
    %s56 = sadd.s32 %s28, 3
    %s57 = sld [smem:[#allocation3 + %s56]]
    %p58 = scmp.gt.s32.totalorder %s57, 0
    %s59 = scalar_select %p58, %s57, 0
    %p60 = scmp.lt.s32.totalorder %s59, 31
    %s61 = scalar_select %p60, %s59, 31
    %s62 = scalar_lea.vmem [#allocation4], %s61
    %v63 = vld [vmem:[%s62] sm:$0x1]
    %64 = vst.msk [vmem:[#allocation7 + $0x3] sm:$0x1] %vm36, %v63
    %s65 = sadd.s32 %s28, 4
    %s66 = sld [smem:[#allocation3 + %s65]]
    %p67 = scmp.gt.s32.totalorder %s66, 0
    %s68 = scalar_select %p67, %s66, 0
    %p69 = scmp.lt.s32.totalorder %s68, 31
    %s70 = scalar_select %p69, %s68, 31
    %s71 = scalar_lea.vmem [#allocation4], %s70
    %v72 = vld [vmem:[%s71] sm:$0x1]
    %73 = vst.msk [vmem:[#allocation7 + $0x4] sm:$0x1] %vm36, %v72
    %s74 = sadd.s32 %s28, 5
    %s75 = sld [smem:[#allocation3 + %s74]]
    %p76 = scmp.gt.s32.totalorder %s75, 0
    %s77 = scalar_select %p76, %s75, 0
    %p78 = scmp.lt.s32.totalorder %s77, 31
    %s79 = scalar_select %p78, %s77, 31
    %s80 = scalar_lea.vmem [#allocation4], %s79
    %v81 = vld [vmem:[%s80] sm:$0x1]
    %82 = vst.msk [vmem:[#allocation7 + $0x5] sm:$0x1] %vm36, %v81
    %s83 = sadd.s32 %s28, 6
    %s84 = sld [smem:[#allocation3 + %s83]]
    %p85 = scmp.gt.s32.totalorder %s84, 0
    %s86 = scalar_select %p85, %s84, 0
    %p87 = scmp.lt.s32.totalorder %s86, 31
    %s88 = scalar_select %p87, %s86, 31
    %s89 = scalar_lea.vmem [#allocation4], %s88
    %v90 = vld [vmem:[%s89] sm:$0x1]
    %91 = vst.msk [vmem:[#allocation7 + $0x6] sm:$0x1] %vm36, %v90
    %s92 = sadd.s32 %s28, 7
    %s93 = sld [smem:[#allocation3 + %s92]]
    %p94 = scmp.gt.s32.totalorder %s93, 0
    %s95 = scalar_select %p94, %s93, 0
    %p96 = scmp.lt.s32.totalorder %s95, 31
    %s97 = scalar_select %p96, %s95, 31
    %s98 = scalar_lea.vmem [#allocation4], %s97
    %v99 = vld [vmem:[%s98] sm:$0x1]
    %100 = vst.msk [vmem:[#allocation7 + $0x7] sm:$0x1] %vm36, %v99
    %s101 = sadd.s32 %s28, 8
    %s102 = sld [smem:[#allocation3 + %s101]]
    %p103 = scmp.gt.s32.totalorder %s102, 0
    %s104 = scalar_select %p103, %s102, 0
    %p105 = scmp.lt.s32.totalorder %s104, 31
    %s106 = scalar_select %p105, %s104, 31
    %s107 = scalar_lea.vmem [#allocation4], %s106
    %v108 = vld [vmem:[%s107] sm:$0x1]
    %109 = vst.msk [vmem:[#allocation7 + $0x8] sm:$0x1] %vm36, %v108
    %s110 = sadd.s32 %s28, 9
    %s111 = sld [smem:[#allocation3 + %s110]]
    %p112 = scmp.gt.s32.totalorder %s111, 0
    %s113 = scalar_select %p112, %s111, 0
    %p114 = scmp.lt.s32.totalorder %s113, 31
    %s115 = scalar_select %p114, %s113, 31
    %s116 = scalar_lea.vmem [#allocation4], %s115
    %v117 = vld [vmem:[%s116] sm:$0x1]
    %118 = vst.msk [vmem:[#allocation7 + $0x9] sm:$0x1] %vm36, %v117
    %s119 = sadd.s32 %s28, 10
    %s120 = sld [smem:[#allocation3 + %s119]]
    %p121 = scmp.gt.s32.totalorder %s120, 0
    %s122 = scalar_select %p121, %s120, 0
    %p123 = scmp.lt.s32.totalorder %s122, 31
    %s124 = scalar_select %p123, %s122, 31
    %s125 = scalar_lea.vmem [#allocation4], %s124
    %v126 = vld [vmem:[%s125] sm:$0x1]
    %127 = vst.msk [vmem:[#allocation7 + $0xa] sm:$0x1] %vm36, %v126
    %s128 = sadd.s32 %s28, 11
    %s129 = sld [smem:[#allocation3 + %s128]]
    %p130 = scmp.gt.s32.totalorder %s129, 0
    %s131 = scalar_select %p130, %s129, 0
    %p132 = scmp.lt.s32.totalorder %s131, 31
    %s133 = scalar_select %p132, %s131, 31
    %s134 = scalar_lea.vmem [#allocation4], %s133
    %v135 = vld [vmem:[%s134] sm:$0x1]
    %136 = vst.msk [vmem:[#allocation7 + $0xb] sm:$0x1] %vm36, %v135
    %s137 = sadd.s32 %s28, 12
    %s138 = sld [smem:[#allocation3 + %s137]]
    %p139 = scmp.gt.s32.totalorder %s138, 0
    %s140 = scalar_select %p139, %s138, 0
    %p141 = scmp.lt.s32.totalorder %s140, 31
    %s142 = scalar_select %p141, %s140, 31
    %s143 = scalar_lea.vmem [#allocation4], %s142
    %v144 = vld [vmem:[%s143] sm:$0x1]
    %145 = vst.msk [vmem:[#allocation7 + $0xc] sm:$0x1] %vm36, %v144
    %s146 = sadd.s32 %s28, 13
    %s147 = sld [smem:[#allocation3 + %s146]]
    %p148 = scmp.gt.s32.totalorder %s147, 0
    %s149 = scalar_select %p148, %s147, 0
    %p150 = scmp.lt.s32.totalorder %s149, 31
    %s151 = scalar_select %p150, %s149, 31
    %s152 = scalar_lea.vmem [#allocation4], %s151
    %v153 = vld [vmem:[%s152] sm:$0x1]
    %154 = vst.msk [vmem:[#allocation7 + $0xd] sm:$0x1] %vm36, %v153
    %s155 = sadd.s32 %s28, 14
    %s156 = sld [smem:[#allocation3 + %s155]]
    %p157 = scmp.gt.s32.totalorder %s156, 0
    %s158 = scalar_select %p157, %s156, 0
    %p159 = scmp.lt.s32.totalorder %s158, 31
    %s160 = scalar_select %p159, %s158, 31
    %s161 = scalar_lea.vmem [#allocation4], %s160
    %v162 = vld [vmem:[%s161] sm:$0x1]
    %163 = vst.msk [vmem:[#allocation7 + $0xe] sm:$0x1] %vm36, %v162
    %s164 = sadd.s32 %s28, 15
    %s165 = sld [smem:[#allocation3 + %s164]]
    %p166 = scmp.gt.s32.totalorder %s165, 0
    %s167 = scalar_select %p166, %s165, 0
    %p168 = scmp.lt.s32.totalorder %s167, 31
    %s169 = scalar_select %p168, %s167, 31
    %s170 = scalar_lea.vmem [#allocation4], %s169
    %v171 = vld [vmem:[%s170] sm:$0x1]
    %172 = vst.msk [vmem:[#allocation7 + $0xf] sm:$0x1] %vm36, %v171
    // Predicated region
    $region10: #{tpu_custom_call.1} parent=1 // pred_check
      _
    $region11: #{tpu_custom_call.1} parent=1 // pred_check_branch
      %174 = sbr.rel (0) target = $region13
    $region12: #{tpu_custom_call.1} parent=1 // pred_region
      %s176 = ssub.s32 256, 256
      %177 = vsyncadd [#allocation6], %s176
      %s178 = sshll.u32 [#allocation7], 4
      %s179 = int_to_ptr.vmem [resolvable:$true] %s178
      %184 = dma.vmem_to_hbm [thread:$0]  %s179, 256, %s2, [#allocation6], 128, 128, 8
    $region13: #{tpu_custom_call.1} parent=1 // pred_fallthru
      _
    // Predicated region
    $region14: #{tpu_custom_call.1} parent=1 // pred_check
      _
    $region15: #{tpu_custom_call.1} parent=1 // pred_check_branch
      %186 = sbr.rel (0) target = $region17
    $region16: #{tpu_custom_call.1} parent=1 // pred_region
      %187 = dma.done [#allocation6], 256
    $region17: #{tpu_custom_call.1} parent=1 // pred_fallthru
      _
    %188 = vsyncpa [#allocation5], 1
    %189 = vsyncpa [#allocation6], 1

</llo_original>
